<compile_context>
chip_gen: v5e
topology: v5e:2x2
jax: 0.10.0
libtpu: 0.0.40
codegen_flags: <defaults>
</compile_context>

<pallas_src>
import jax
import jax.numpy as jnp
from jax.experimental import pallas as pl
from jax.experimental.pallas import tpu as pltpu


def _mnf_kernel(z_ref, mask_ref, w1_ref, b1_ref, wh_ref, bh_ref,
                wms_ref, bms_ref, z_out_ref, logdet_ref):
    n_flows, _, d = mask_ref.shape          # (NF, 1, D)
    n_hidden = wh_ref.shape[1]              # (NF, NH, H, H)

    z = z_ref[...]                          # (TB, D) f32, carried in vregs
    logdet = jnp.zeros((z.shape[0], 1), jnp.float32)

    for f in range(n_flows):                # static unroll over flows
        m = mask_ref[f]                     # (1, D) per-flow bernoulli mask
        one_minus_m = 1.0 - m               # hoisted: reused 3x below

        # h = tanh(Linear(mask * z))         (tanh -> EUP slot)
        h = jnp.tanh(
            jnp.dot(m * z, w1_ref[f], preferred_element_type=jnp.float32)
            + b1_ref[f])

        # hidden stack: n_hidden x (Linear + tanh); static ref indexing
        for i in range(n_hidden):
            h = jnp.tanh(
                jnp.dot(h, wh_ref[f, i], preferred_element_type=jnp.float32)
                + bh_ref[f, i])

        # fused mu / sigma head: one (H, 2D) matmul, then split along lanes
        ms = (jnp.dot(h, wms_ref[f], preferred_element_type=jnp.float32)
              + bms_ref[f])                 # (TB, 2D)
        mu = ms[:, :d]
        sigma = jax.nn.sigmoid(ms[:, d:])   # logistic -> EUP slot
        one_minus_sigma = 1.0 - sigma

        # z <- (1 - m) * (z * sigma + (1 - sigma) * mu) + m * z
        z = one_minus_m * (z * sigma + one_minus_sigma * mu) + m * z

        # logdets += ((1 - m) * log(sigma)).sum(1)     (log -> EUP, sum -> XLU)
        logdet = logdet + jnp.sum(one_minus_m * jnp.log(sigma),
                                  axis=1, keepdims=True)

    # single dense writeback at the end (no per-flow HBM traffic)
    z_out_ref[...] = z
    logdet_ref[...] = logdet


def _pick_batch_tile(B):
    """Largest power-of-two tile <= 512 that divides B (else the full batch)."""
    if B <= 512:
        return B
    for cand in (512, 256, 128, 64, 32, 16, 8):
        if B % cand == 0:
            return cand
    return B


@jax.jit
def masked_nvp_flow(z, mask, W1, b1, Wh, bh, Wmu, bmu, Wsig, bsig):
    """Forward pass of MaskedNVPFlow (training mode, kl=True).

    Returns (z_out, logdets) with z_out shape (B, D) and logdets shape (B,).
    """
    B, D = z.shape
    n_flows, NH, H, _ = Wh.shape

    # Fuse mu / sigma heads into one weight & bias per flow.
    Wms = jnp.concatenate([Wmu, Wsig], axis=-1)               # (NF, H, 2D)
    bms = jnp.concatenate([bmu, bsig], axis=-1)[:, None, :]   # (NF, 1, 2D)
    mask3 = mask[:, None, :]                                   # (NF, 1, D)
    b1r = b1[:, None, :]                                       # (NF, 1, H)
    bhr = bh[:, :, None, :]                                    # (NF, NH, 1, H)

    # Parallel batch tiling: one tile at small B, shards over TCs for large B.
    tb = _pick_batch_tile(B)
    grid = (B // tb,)

    z_out, logdet = pl.pallas_call(
        _mnf_kernel,
        out_shape=(
            jax.ShapeDtypeStruct((B, D), z.dtype),
            jax.ShapeDtypeStruct((B, 1), jnp.float32),
        ),
        grid_spec=pl.GridSpec(
            grid=grid,
            in_specs=[
                pl.BlockSpec((tb, D), lambda i: (i, 0)),                    # z
                pl.BlockSpec((n_flows, 1, D), lambda i: (0, 0, 0)),         # mask
                pl.BlockSpec((n_flows, D, H), lambda i: (0, 0, 0)),         # W1
                pl.BlockSpec((n_flows, 1, H), lambda i: (0, 0, 0)),         # b1
                pl.BlockSpec((n_flows, NH, H, H), lambda i: (0, 0, 0, 0)),  # Wh
                pl.BlockSpec((n_flows, NH, 1, H), lambda i: (0, 0, 0, 0)),  # bh
                pl.BlockSpec((n_flows, H, 2 * D), lambda i: (0, 0, 0)),     # Wmu|Wsig
                pl.BlockSpec((n_flows, 1, 2 * D), lambda i: (0, 0, 0)),     # bmu|bsig
            ],
            out_specs=(
                pl.BlockSpec((tb, D), lambda i: (i, 0)),                    # z_out
                pl.BlockSpec((tb, 1), lambda i: (i, 0)),                    # logdets
            ),
        ),
        input_output_aliases={0: 0},                                        # z -> z_out
        compiler_params=pltpu.CompilerParams(
            dimension_semantics=("parallel",),
        ),
    )(z, mask3, W1, b1r, Wh, bhr, Wms, bms)

    return z_out, logdet[:, 0]


def _reference(z, mask, W1, b1, Wh, bh, Wmu, bmu, Wsig, bsig):
    """Pure-JAX reference matching the PyTorch forward (training, kl=True)."""
    n_flows, NH = Wh.shape[0], Wh.shape[1]
    logdets = jnp.zeros((z.shape[0],), jnp.float32)
    for f in range(n_flows):
        m = mask[f]
        h = jnp.tanh((m * z) @ W1[f] + b1[f])
        for i in range(NH):
            h = jnp.tanh(h @ Wh[f, i] + bh[f, i])
        mu = h @ Wmu[f] + bmu[f]
        sig = jax.nn.sigmoid(h @ Wsig[f] + bsig[f])
        z = (1.0 - m) * (z * sig + (1.0 - sig) * mu) + m * z
        logdets = logdets + jnp.sum((1.0 - m) * jnp.log(sig), axis=1)
    return z, logdets


def _init_params(key, n_flows, n_hidden, input_dim, hidden_dim):
    """Deterministic synthetic init (uniform a la nn.Linear default)."""
    ks = jax.random.split(key, 9)

    def u(k, shape, fan_in):
        bound = 1.0 / jnp.sqrt(jnp.float32(fan_in))
        return jax.random.uniform(k, shape, jnp.float32, -bound, bound)

    W1 = u(ks[0], (n_flows, input_dim, hidden_dim), input_dim)
    b1 = u(ks[1], (n_flows, hidden_dim), input_dim)
    Wh = u(ks[2], (n_flows, n_hidden, hidden_dim, hidden_dim), hidden_dim)
    bh = u(ks[3], (n_flows, n_hidden, hidden_dim), hidden_dim)
    Wmu = u(ks[4], (n_flows, hidden_dim, input_dim), hidden_dim)
    bmu = u(ks[5], (n_flows, input_dim), hidden_dim)
    Wsig = u(ks[6], (n_flows, hidden_dim, input_dim), hidden_dim)
    bsig = u(ks[7], (n_flows, input_dim), hidden_dim)
    # reset_noise(): bernoulli(0.5) mask per flow (float, like the torch buffer)
    mask = jax.random.bernoulli(ks[8], 0.5, (n_flows, input_dim)).astype(jnp.float32)
    return mask, W1, b1, Wh, bh, Wmu, bmu, Wsig, bsig


if __name__ == "__main__":
    # Small shapes consistent with the module: input_dim=16, hidden_dim=32,
    # n_hidden=2, n_flows=3, batch=8.
    B, D, H, NH, NF = 8, 16, 32, 2, 3

    key = jax.random.PRNGKey(0)
    kz, kp = jax.random.split(key)
    z = jax.random.normal(kz, (B, D), jnp.float32)
    params = _init_params(kp, NF, NH, D, H)

    z_out, logdets = masked_nvp_flow(z, *params)
    jax.block_until_ready((z_out, logdets))

    # Silent numerical check against the pure-JAX reference.
    z_ref, ld_ref = _reference(z, *params)
    assert jnp.allclose(z_out, z_ref, atol=1e-5, rtol=1e-5)
    assert jnp.allclose(logdets, ld_ref, atol=1e-5, rtol=1e-5)

    print("KERNEL_OK")
</pallas_src>

<mosaic_0001>
module attributes {stable_mosaic.version = 11 : i64} {
  func.func @_mnf_kernel(%arg0: i32, %arg1: memref<8x16xf32, #tpu.memory_space<vmem>>, %arg2: memref<3x1x16xf32, #tpu.memory_space<vmem>>, %arg3: memref<3x16x32xf32, #tpu.memory_space<vmem>>, %arg4: memref<3x1x32xf32, #tpu.memory_space<vmem>>, %arg5: memref<3x2x32x32xf32, #tpu.memory_space<vmem>>, %arg6: memref<3x2x1x32xf32, #tpu.memory_space<vmem>>, %arg7: memref<3x32x32xf32, #tpu.memory_space<vmem>>, %arg8: memref<3x1x32xf32, #tpu.memory_space<vmem>>, %arg9: memref<8x16xf32, #tpu.memory_space<vmem>>, %arg10: memref<8x1xf32, #tpu.memory_space<vmem>>) attributes {dimension_semantics = [#tpu.dimension_semantics<parallel>], iteration_bounds = array<i64: 1>, scalar_prefetch = 0 : i64, scratch_operands = 0 : i64, tpu.core_type = #tpu.core_type<tc>, window_params = [{transform_indices = @transform_0, window_bounds = array<i64: 8, 16>}, {pipeline_mode = #tpu.pipeline_mode<synchronous>, transform_indices = @transform_1, window_bounds = array<i64: 3, 1, 16>}, {pipeline_mode = #tpu.pipeline_mode<synchronous>, transform_indices = @transform_2, window_bounds = array<i64: 3, 16, 32>}, {pipeline_mode = #tpu.pipeline_mode<synchronous>, transform_indices = @transform_3, window_bounds = array<i64: 3, 1, 32>}, {pipeline_mode = #tpu.pipeline_mode<synchronous>, transform_indices = @transform_4, window_bounds = array<i64: 3, 2, 32, 32>}, {pipeline_mode = #tpu.pipeline_mode<synchronous>, transform_indices = @transform_5, window_bounds = array<i64: 3, 2, 1, 32>}, {pipeline_mode = #tpu.pipeline_mode<synchronous>, transform_indices = @transform_6, window_bounds = array<i64: 3, 32, 32>}, {pipeline_mode = #tpu.pipeline_mode<synchronous>, transform_indices = @transform_7, window_bounds = array<i64: 3, 1, 32>}, {transform_indices = @transform_8, window_bounds = array<i64: 8, 16>}, {transform_indices = @transform_9, window_bounds = array<i64: 8, 1>}]} {
    %c0 = arith.constant 0 : index
    %c0_0 = arith.constant 0 : index
    %0 = vector.load %arg1[%c0, %c0_0] : memref<8x16xf32, #tpu.memory_space<vmem>>, vector<8x16xf32>
    %cst = arith.constant 0.000000e+00 : f32
    %1 = vector.broadcast %cst : f32 to vector<8x1xf32>
    %c0_1 = arith.constant 0 : index
    %c0_2 = arith.constant 0 : index
    %c0_3 = arith.constant 0 : index
    %2 = vector.load %arg2[%c0_1, %c0_2, %c0_3] : memref<3x1x16xf32, #tpu.memory_space<vmem>>, vector<1x1x16xf32>
    %3 = vector.shape_cast %2 : vector<1x1x16xf32> to vector<1x16xf32>
    %cst_4 = arith.constant 1.000000e+00 : f32
    %4 = vector.broadcast %cst_4 : f32 to vector<1x16xf32>
    %5 = arith.subf %4, %3 : vector<1x16xf32>
    %6 = vector.broadcast %3 : vector<1x16xf32> to vector<8x16xf32>
    %7 = arith.mulf %6, %0 : vector<8x16xf32>
    %c0_5 = arith.constant 0 : index
    %c0_6 = arith.constant 0 : index
    %c0_7 = arith.constant 0 : index
    %8 = vector.load %arg3[%c0_5, %c0_6, %c0_7] : memref<3x16x32xf32, #tpu.memory_space<vmem>>, vector<1x16x32xf32>
    %9 = vector.shape_cast %8 : vector<1x16x32xf32> to vector<16x32xf32>
    %cst_8 = arith.constant dense<0.000000e+00> : vector<8x32xf32>
    %10 = tpu.matmul %7, %9, %cst_8 {dimension_numbers = #tpu.dot_dimension_numbers<[1], [0], [0], [1], [0, 0, 1, 1], [], []>} : vector<8x16xf32>, vector<16x32xf32>, vector<8x32xf32> -> vector<8x32xf32>
    %c0_9 = arith.constant 0 : index
    %c0_10 = arith.constant 0 : index
    %c0_11 = arith.constant 0 : index
    %11 = vector.load %arg4[%c0_9, %c0_10, %c0_11] : memref<3x1x32xf32, #tpu.memory_space<vmem>>, vector<1x1x32xf32>
    %12 = vector.shape_cast %11 : vector<1x1x32xf32> to vector<1x32xf32>
    %13 = vector.broadcast %12 : vector<1x32xf32> to vector<8x32xf32>
    %14 = arith.addf %10, %13 : vector<8x32xf32>
    %15 = math.tanh %14 : vector<8x32xf32>
    %c0_12 = arith.constant 0 : index
    %c0_13 = arith.constant 0 : index
    %c0_14 = arith.constant 0 : index
    %c0_15 = arith.constant 0 : index
    %16 = vector.load %arg5[%c0_12, %c0_13, %c0_14, %c0_15] : memref<3x2x32x32xf32, #tpu.memory_space<vmem>>, vector<1x1x32x32xf32>
    %17 = vector.shape_cast %16 : vector<1x1x32x32xf32> to vector<32x32xf32>
    %cst_16 = arith.constant dense<0.000000e+00> : vector<8x32xf32>
    %18 = tpu.matmul %15, %17, %cst_16 {dimension_numbers = #tpu.dot_dimension_numbers<[1], [0], [0], [1], [0, 0, 1, 1], [], []>} : vector<8x32xf32>, vector<32x32xf32>, vector<8x32xf32> -> vector<8x32xf32>
    %c0_17 = arith.constant 0 : index
    %c0_18 = arith.constant 0 : index
    %c0_19 = arith.constant 0 : index
    %c0_20 = arith.constant 0 : index
    %19 = vector.load %arg6[%c0_17, %c0_18, %c0_19, %c0_20] : memref<3x2x1x32xf32, #tpu.memory_space<vmem>>, vector<1x1x1x32xf32>
    %20 = vector.shape_cast %19 : vector<1x1x1x32xf32> to vector<1x32xf32>
    %21 = vector.broadcast %20 : vector<1x32xf32> to vector<8x32xf32>
    %22 = arith.addf %18, %21 : vector<8x32xf32>
    %23 = math.tanh %22 : vector<8x32xf32>
    %c0_21 = arith.constant 0 : index
    %c1 = arith.constant 1 : index
    %c0_22 = arith.constant 0 : index
    %c0_23 = arith.constant 0 : index
    %24 = vector.load %arg5[%c0_21, %c1, %c0_22, %c0_23] : memref<3x2x32x32xf32, #tpu.memory_space<vmem>>, vector<1x1x32x32xf32>
    %25 = vector.shape_cast %24 : vector<1x1x32x32xf32> to vector<32x32xf32>
    %cst_24 = arith.constant dense<0.000000e+00> : vector<8x32xf32>
    %26 = tpu.matmul %23, %25, %cst_24 {dimension_numbers = #tpu.dot_dimension_numbers<[1], [0], [0], [1], [0, 0, 1, 1], [], []>} : vector<8x32xf32>, vector<32x32xf32>, vector<8x32xf32> -> vector<8x32xf32>
    %c0_25 = arith.constant 0 : index
    %c1_26 = arith.constant 1 : index
    %c0_27 = arith.constant 0 : index
    %c0_28 = arith.constant 0 : index
    %27 = vector.load %arg6[%c0_25, %c1_26, %c0_27, %c0_28] : memref<3x2x1x32xf32, #tpu.memory_space<vmem>>, vector<1x1x1x32xf32>
    %28 = vector.shape_cast %27 : vector<1x1x1x32xf32> to vector<1x32xf32>
    %29 = vector.broadcast %28 : vector<1x32xf32> to vector<8x32xf32>
    %30 = arith.addf %26, %29 : vector<8x32xf32>
    %31 = math.tanh %30 : vector<8x32xf32>
    %c0_29 = arith.constant 0 : index
    %c0_30 = arith.constant 0 : index
    %c0_31 = arith.constant 0 : index
    %32 = vector.load %arg7[%c0_29, %c0_30, %c0_31] : memref<3x32x32xf32, #tpu.memory_space<vmem>>, vector<1x32x32xf32>
    %33 = vector.shape_cast %32 : vector<1x32x32xf32> to vector<32x32xf32>
    %cst_32 = arith.constant dense<0.000000e+00> : vector<8x32xf32>
    %34 = tpu.matmul %31, %33, %cst_32 {dimension_numbers = #tpu.dot_dimension_numbers<[1], [0], [0], [1], [0, 0, 1, 1], [], []>} : vector<8x32xf32>, vector<32x32xf32>, vector<8x32xf32> -> vector<8x32xf32>
    %c0_33 = arith.constant 0 : index
    %c0_34 = arith.constant 0 : index
    %c0_35 = arith.constant 0 : index
    %35 = vector.load %arg8[%c0_33, %c0_34, %c0_35] : memref<3x1x32xf32, #tpu.memory_space<vmem>>, vector<1x1x32xf32>
    %36 = vector.shape_cast %35 : vector<1x1x32xf32> to vector<1x32xf32>
    %37 = vector.broadcast %36 : vector<1x32xf32> to vector<8x32xf32>
    %38 = arith.addf %34, %37 : vector<8x32xf32>
    %39 = vector.extract_strided_slice %38 {offsets = [0, 0], sizes = [8, 16], strides = [1, 1]} : vector<8x32xf32> to vector<8x16xf32>
    %40 = vector.extract_strided_slice %38 {offsets = [0, 16], sizes = [8, 16], strides = [1, 1]} : vector<8x32xf32> to vector<8x16xf32>
    %41 = arith.negf %40 : vector<8x16xf32>
    %42 = math.exp %41 : vector<8x16xf32>
    %cst_36 = arith.constant 1.000000e+00 : f32
    %43 = vector.broadcast %cst_36 : f32 to vector<8x16xf32>
    %44 = arith.addf %43, %42 : vector<8x16xf32>
    %45 = arith.divf %43, %44 : vector<8x16xf32>
    %cst_37 = arith.constant 1.000000e+00 : f32
    %46 = vector.broadcast %cst_37 : f32 to vector<8x16xf32>
    %47 = arith.subf %46, %45 : vector<8x16xf32>
    %48 = arith.mulf %0, %45 : vector<8x16xf32>
    %49 = arith.mulf %47, %39 : vector<8x16xf32>
    %50 = arith.addf %48, %49 : vector<8x16xf32>
    %51 = vector.broadcast %5 : vector<1x16xf32> to vector<8x16xf32>
    %52 = arith.mulf %51, %50 : vector<8x16xf32>
    %53 = vector.broadcast %3 : vector<1x16xf32> to vector<8x16xf32>
    %54 = arith.mulf %53, %0 : vector<8x16xf32>
    %55 = arith.addf %52, %54 : vector<8x16xf32>
    %56 = math.log %45 : vector<8x16xf32>
    %57 = vector.broadcast %5 : vector<1x16xf32> to vector<8x16xf32>
    %58 = arith.mulf %57, %56 : vector<8x16xf32>
    %cst_38 = arith.constant dense<0.000000e+00> : vector<8xf32>
    %59 = vector.multi_reduction <add>, %58, %cst_38 [1] : vector<8x16xf32> to vector<8xf32>
    %60 = vector.shape_cast %59 : vector<8xf32> to vector<8x1xf32>
    %61 = arith.addf %1, %60 : vector<8x1xf32>
    %c1_39 = arith.constant 1 : index
    %c0_40 = arith.constant 0 : index
    %c0_41 = arith.constant 0 : index
    %62 = vector.load %arg2[%c1_39, %c0_40, %c0_41] : memref<3x1x16xf32, #tpu.memory_space<vmem>>, vector<1x1x16xf32>
    %63 = vector.shape_cast %62 : vector<1x1x16xf32> to vector<1x16xf32>
    %cst_42 = arith.constant 1.000000e+00 : f32
    %64 = vector.broadcast %cst_42 : f32 to vector<1x16xf32>
    %65 = arith.subf %64, %63 : vector<1x16xf32>
    %66 = vector.broadcast %63 : vector<1x16xf32> to vector<8x16xf32>
    %67 = arith.mulf %66, %55 : vector<8x16xf32>
    %c1_43 = arith.constant 1 : index
    %c0_44 = arith.constant 0 : index
    %c0_45 = arith.constant 0 : index
    %68 = vector.load %arg3[%c1_43, %c0_44, %c0_45] : memref<3x16x32xf32, #tpu.memory_space<vmem>>, vector<1x16x32xf32>
    %69 = vector.shape_cast %68 : vector<1x16x32xf32> to vector<16x32xf32>
    %cst_46 = arith.constant dense<0.000000e+00> : vector<8x32xf32>
    %70 = tpu.matmul %67, %69, %cst_46 {dimension_numbers = #tpu.dot_dimension_numbers<[1], [0], [0], [1], [0, 0, 1, 1], [], []>} : vector<8x16xf32>, vector<16x32xf32>, vector<8x32xf32> -> vector<8x32xf32>
    %c1_47 = arith.constant 1 : index
    %c0_48 = arith.constant 0 : index
    %c0_49 = arith.constant 0 : index
    %71 = vector.load %arg4[%c1_47, %c0_48, %c0_49] : memref<3x1x32xf32, #tpu.memory_space<vmem>>, vector<1x1x32xf32>
    %72 = vector.shape_cast %71 : vector<1x1x32xf32> to vector<1x32xf32>
    %73 = vector.broadcast %72 : vector<1x32xf32> to vector<8x32xf32>
    %74 = arith.addf %70, %73 : vector<8x32xf32>
    %75 = math.tanh %74 : vector<8x32xf32>
    %c1_50 = arith.constant 1 : index
    %c0_51 = arith.constant 0 : index
    %c0_52 = arith.constant 0 : index
    %c0_53 = arith.constant 0 : index
    %76 = vector.load %arg5[%c1_50, %c0_51, %c0_52, %c0_53] : memref<3x2x32x32xf32, #tpu.memory_space<vmem>>, vector<1x1x32x32xf32>
    %77 = vector.shape_cast %76 : vector<1x1x32x32xf32> to vector<32x32xf32>
    %cst_54 = arith.constant dense<0.000000e+00> : vector<8x32xf32>
    %78 = tpu.matmul %75, %77, %cst_54 {dimension_numbers = #tpu.dot_dimension_numbers<[1], [0], [0], [1], [0, 0, 1, 1], [], []>} : vector<8x32xf32>, vector<32x32xf32>, vector<8x32xf32> -> vector<8x32xf32>
    %c1_55 = arith.constant 1 : index
    %c0_56 = arith.constant 0 : index
    %c0_57 = arith.constant 0 : index
    %c0_58 = arith.constant 0 : index
    %79 = vector.load %arg6[%c1_55, %c0_56, %c0_57, %c0_58] : memref<3x2x1x32xf32, #tpu.memory_space<vmem>>, vector<1x1x1x32xf32>
    %80 = vector.shape_cast %79 : vector<1x1x1x32xf32> to vector<1x32xf32>
    %81 = vector.broadcast %80 : vector<1x32xf32> to vector<8x32xf32>
    %82 = arith.addf %78, %81 : vector<8x32xf32>
    %83 = math.tanh %82 : vector<8x32xf32>
    %c1_59 = arith.constant 1 : index
    %c1_60 = arith.constant 1 : index
    %c0_61 = arith.constant 0 : index
    %c0_62 = arith.constant 0 : index
    %84 = vector.load %arg5[%c1_59, %c1_60, %c0_61, %c0_62] : memref<3x2x32x32xf32, #tpu.memory_space<vmem>>, vector<1x1x32x32xf32>
    %85 = vector.shape_cast %84 : vector<1x1x32x32xf32> to vector<32x32xf32>
    %cst_63 = arith.constant dense<0.000000e+00> : vector<8x32xf32>
    %86 = tpu.matmul %83, %85, %cst_63 {dimension_numbers = #tpu.dot_dimension_numbers<[1], [0], [0], [1], [0, 0, 1, 1], [], []>} : vector<8x32xf32>, vector<32x32xf32>, vector<8x32xf32> -> vector<8x32xf32>
    %c1_64 = arith.constant 1 : index
    %c1_65 = arith.constant 1 : index
    %c0_66 = arith.constant 0 : index
    %c0_67 = arith.constant 0 : index
    %87 = vector.load %arg6[%c1_64, %c1_65, %c0_66, %c0_67] : memref<3x2x1x32xf32, #tpu.memory_space<vmem>>, vector<1x1x1x32xf32>
    %88 = vector.shape_cast %87 : vector<1x1x1x32xf32> to vector<1x32xf32>
    %89 = vector.broadcast %88 : vector<1x32xf32> to vector<8x32xf32>
    %90 = arith.addf %86, %89 : vector<8x32xf32>
    %91 = math.tanh %90 : vector<8x32xf32>
    %c1_68 = arith.constant 1 : index
    %c0_69 = arith.constant 0 : index
    %c0_70 = arith.constant 0 : index
    %92 = vector.load %arg7[%c1_68, %c0_69, %c0_70] : memref<3x32x32xf32, #tpu.memory_space<vmem>>, vector<1x32x32xf32>
    %93 = vector.shape_cast %92 : vector<1x32x32xf32> to vector<32x32xf32>
    %cst_71 = arith.constant dense<0.000000e+00> : vector<8x32xf32>
    %94 = tpu.matmul %91, %93, %cst_71 {dimension_numbers = #tpu.dot_dimension_numbers<[1], [0], [0], [1], [0, 0, 1, 1], [], []>} : vector<8x32xf32>, vector<32x32xf32>, vector<8x32xf32> -> vector<8x32xf32>
    %c1_72 = arith.constant 1 : index
    %c0_73 = arith.constant 0 : index
    %c0_74 = arith.constant 0 : index
    %95 = vector.load %arg8[%c1_72, %c0_73, %c0_74] : memref<3x1x32xf32, #tpu.memory_space<vmem>>, vector<1x1x32xf32>
    %96 = vector.shape_cast %95 : vector<1x1x32xf32> to vector<1x32xf32>
    %97 = vector.broadcast %96 : vector<1x32xf32> to vector<8x32xf32>
    %98 = arith.addf %94, %97 : vector<8x32xf32>
    %99 = vector.extract_strided_slice %98 {offsets = [0, 0], sizes = [8, 16], strides = [1, 1]} : vector<8x32xf32> to vector<8x16xf32>
    %100 = vector.extract_strided_slice %98 {offsets = [0, 16], sizes = [8, 16], strides = [1, 1]} : vector<8x32xf32> to vector<8x16xf32>
    %101 = arith.negf %100 : vector<8x16xf32>
    %102 = math.exp %101 : vector<8x16xf32>
    %cst_75 = arith.constant 1.000000e+00 : f32
    %103 = vector.broadcast %cst_75 : f32 to vector<8x16xf32>
    %104 = arith.addf %103, %102 : vector<8x16xf32>
    %105 = arith.divf %103, %104 : vector<8x16xf32>
    %cst_76 = arith.constant 1.000000e+00 : f32
    %106 = vector.broadcast %cst_76 : f32 to vector<8x16xf32>
    %107 = arith.subf %106, %105 : vector<8x16xf32>
    %108 = arith.mulf %55, %105 : vector<8x16xf32>
    %109 = arith.mulf %107, %99 : vector<8x16xf32>
    %110 = arith.addf %108, %109 : vector<8x16xf32>
    %111 = vector.broadcast %65 : vector<1x16xf32> to vector<8x16xf32>
    %112 = arith.mulf %111, %110 : vector<8x16xf32>
    %113 = vector.broadcast %63 : vector<1x16xf32> to vector<8x16xf32>
    %114 = arith.mulf %113, %55 : vector<8x16xf32>
    %115 = arith.addf %112, %114 : vector<8x16xf32>
    %116 = math.log %105 : vector<8x16xf32>
    %117 = vector.broadcast %65 : vector<1x16xf32> to vector<8x16xf32>
    %118 = arith.mulf %117, %116 : vector<8x16xf32>
    %cst_77 = arith.constant dense<0.000000e+00> : vector<8xf32>
    %119 = vector.multi_reduction <add>, %118, %cst_77 [1] : vector<8x16xf32> to vector<8xf32>
    %120 = vector.shape_cast %119 : vector<8xf32> to vector<8x1xf32>
    %121 = arith.addf %61, %120 : vector<8x1xf32>
    %c2 = arith.constant 2 : index
    %c0_78 = arith.constant 0 : index
    %c0_79 = arith.constant 0 : index
    %122 = vector.load %arg2[%c2, %c0_78, %c0_79] : memref<3x1x16xf32, #tpu.memory_space<vmem>>, vector<1x1x16xf32>
    %123 = vector.shape_cast %122 : vector<1x1x16xf32> to vector<1x16xf32>
    %cst_80 = arith.constant 1.000000e+00 : f32
    %124 = vector.broadcast %cst_80 : f32 to vector<1x16xf32>
    %125 = arith.subf %124, %123 : vector<1x16xf32>
    %126 = vector.broadcast %123 : vector<1x16xf32> to vector<8x16xf32>
    %127 = arith.mulf %126, %115 : vector<8x16xf32>
    %c2_81 = arith.constant 2 : index
    %c0_82 = arith.constant 0 : index
    %c0_83 = arith.constant 0 : index
    %128 = vector.load %arg3[%c2_81, %c0_82, %c0_83] : memref<3x16x32xf32, #tpu.memory_space<vmem>>, vector<1x16x32xf32>
    %129 = vector.shape_cast %128 : vector<1x16x32xf32> to vector<16x32xf32>
    %cst_84 = arith.constant dense<0.000000e+00> : vector<8x32xf32>
    %130 = tpu.matmul %127, %129, %cst_84 {dimension_numbers = #tpu.dot_dimension_numbers<[1], [0], [0], [1], [0, 0, 1, 1], [], []>} : vector<8x16xf32>, vector<16x32xf32>, vector<8x32xf32> -> vector<8x32xf32>
    %c2_85 = arith.constant 2 : index
    %c0_86 = arith.constant 0 : index
    %c0_87 = arith.constant 0 : index
    %131 = vector.load %arg4[%c2_85, %c0_86, %c0_87] : memref<3x1x32xf32, #tpu.memory_space<vmem>>, vector<1x1x32xf32>
    %132 = vector.shape_cast %131 : vector<1x1x32xf32> to vector<1x32xf32>
    %133 = vector.broadcast %132 : vector<1x32xf32> to vector<8x32xf32>
    %134 = arith.addf %130, %133 : vector<8x32xf32>
    %135 = math.tanh %134 : vector<8x32xf32>
    %c2_88 = arith.constant 2 : index
    %c0_89 = arith.constant 0 : index
    %c0_90 = arith.constant 0 : index
    %c0_91 = arith.constant 0 : index
    %136 = vector.load %arg5[%c2_88, %c0_89, %c0_90, %c0_91] : memref<3x2x32x32xf32, #tpu.memory_space<vmem>>, vector<1x1x32x32xf32>
    %137 = vector.shape_cast %136 : vector<1x1x32x32xf32> to vector<32x32xf32>
    %cst_92 = arith.constant dense<0.000000e+00> : vector<8x32xf32>
    %138 = tpu.matmul %135, %137, %cst_92 {dimension_numbers = #tpu.dot_dimension_numbers<[1], [0], [0], [1], [0, 0, 1, 1], [], []>} : vector<8x32xf32>, vector<32x32xf32>, vector<8x32xf32> -> vector<8x32xf32>
    %c2_93 = arith.constant 2 : index
    %c0_94 = arith.constant 0 : index
    %c0_95 = arith.constant 0 : index
    %c0_96 = arith.constant 0 : index
    %139 = vector.load %arg6[%c2_93, %c0_94, %c0_95, %c0_96] : memref<3x2x1x32xf32, #tpu.memory_space<vmem>>, vector<1x1x1x32xf32>
    %140 = vector.shape_cast %139 : vector<1x1x1x32xf32> to vector<1x32xf32>
    %141 = vector.broadcast %140 : vector<1x32xf32> to vector<8x32xf32>
    %142 = arith.addf %138, %141 : vector<8x32xf32>
    %143 = math.tanh %142 : vector<8x32xf32>
    %c2_97 = arith.constant 2 : index
    %c1_98 = arith.constant 1 : index
    %c0_99 = arith.constant 0 : index
    %c0_100 = arith.constant 0 : index
    %144 = vector.load %arg5[%c2_97, %c1_98, %c0_99, %c0_100] : memref<3x2x32x32xf32, #tpu.memory_space<vmem>>, vector<1x1x32x32xf32>
    %145 = vector.shape_cast %144 : vector<1x1x32x32xf32> to vector<32x32xf32>
    %cst_101 = arith.constant dense<0.000000e+00> : vector<8x32xf32>
    %146 = tpu.matmul %143, %145, %cst_101 {dimension_numbers = #tpu.dot_dimension_numbers<[1], [0], [0], [1], [0, 0, 1, 1], [], []>} : vector<8x32xf32>, vector<32x32xf32>, vector<8x32xf32> -> vector<8x32xf32>
    %c2_102 = arith.constant 2 : index
    %c1_103 = arith.constant 1 : index
    %c0_104 = arith.constant 0 : index
    %c0_105 = arith.constant 0 : index
    %147 = vector.load %arg6[%c2_102, %c1_103, %c0_104, %c0_105] : memref<3x2x1x32xf32, #tpu.memory_space<vmem>>, vector<1x1x1x32xf32>
    %148 = vector.shape_cast %147 : vector<1x1x1x32xf32> to vector<1x32xf32>
    %149 = vector.broadcast %148 : vector<1x32xf32> to vector<8x32xf32>
    %150 = arith.addf %146, %149 : vector<8x32xf32>
    %151 = math.tanh %150 : vector<8x32xf32>
    %c2_106 = arith.constant 2 : index
    %c0_107 = arith.constant 0 : index
    %c0_108 = arith.constant 0 : index
    %152 = vector.load %arg7[%c2_106, %c0_107, %c0_108] : memref<3x32x32xf32, #tpu.memory_space<vmem>>, vector<1x32x32xf32>
    %153 = vector.shape_cast %152 : vector<1x32x32xf32> to vector<32x32xf32>
    %cst_109 = arith.constant dense<0.000000e+00> : vector<8x32xf32>
    %154 = tpu.matmul %151, %153, %cst_109 {dimension_numbers = #tpu.dot_dimension_numbers<[1], [0], [0], [1], [0, 0, 1, 1], [], []>} : vector<8x32xf32>, vector<32x32xf32>, vector<8x32xf32> -> vector<8x32xf32>
    %c2_110 = arith.constant 2 : index
    %c0_111 = arith.constant 0 : index
    %c0_112 = arith.constant 0 : index
    %155 = vector.load %arg8[%c2_110, %c0_111, %c0_112] : memref<3x1x32xf32, #tpu.memory_space<vmem>>, vector<1x1x32xf32>
    %156 = vector.shape_cast %155 : vector<1x1x32xf32> to vector<1x32xf32>
    %157 = vector.broadcast %156 : vector<1x32xf32> to vector<8x32xf32>
    %158 = arith.addf %154, %157 : vector<8x32xf32>
    %159 = vector.extract_strided_slice %158 {offsets = [0, 0], sizes = [8, 16], strides = [1, 1]} : vector<8x32xf32> to vector<8x16xf32>
    %160 = vector.extract_strided_slice %158 {offsets = [0, 16], sizes = [8, 16], strides = [1, 1]} : vector<8x32xf32> to vector<8x16xf32>
    %161 = arith.negf %160 : vector<8x16xf32>
    %162 = math.exp %161 : vector<8x16xf32>
    %cst_113 = arith.constant 1.000000e+00 : f32
    %163 = vector.broadcast %cst_113 : f32 to vector<8x16xf32>
    %164 = arith.addf %163, %162 : vector<8x16xf32>
    %165 = arith.divf %163, %164 : vector<8x16xf32>
    %cst_114 = arith.constant 1.000000e+00 : f32
    %166 = vector.broadcast %cst_114 : f32 to vector<8x16xf32>
    %167 = arith.subf %166, %165 : vector<8x16xf32>
    %168 = arith.mulf %115, %165 : vector<8x16xf32>
    %169 = arith.mulf %167, %159 : vector<8x16xf32>
    %170 = arith.addf %168, %169 : vector<8x16xf32>
    %171 = vector.broadcast %125 : vector<1x16xf32> to vector<8x16xf32>
    %172 = arith.mulf %171, %170 : vector<8x16xf32>
    %173 = vector.broadcast %123 : vector<1x16xf32> to vector<8x16xf32>
    %174 = arith.mulf %173, %115 : vector<8x16xf32>
    %175 = arith.addf %172, %174 : vector<8x16xf32>
    %176 = math.log %165 : vector<8x16xf32>
    %177 = vector.broadcast %125 : vector<1x16xf32> to vector<8x16xf32>
    %178 = arith.mulf %177, %176 : vector<8x16xf32>
    %cst_115 = arith.constant dense<0.000000e+00> : vector<8xf32>
    %179 = vector.multi_reduction <add>, %178, %cst_115 [1] : vector<8x16xf32> to vector<8xf32>
    %180 = vector.shape_cast %179 : vector<8xf32> to vector<8x1xf32>
    %181 = arith.addf %121, %180 : vector<8x1xf32>
    %c0_116 = arith.constant 0 : index
    %c0_117 = arith.constant 0 : index
    %182 = vector.load %arg9[%c0_116, %c0_117] : memref<8x16xf32, #tpu.memory_space<vmem>>, vector<8x16xf32>
    tpu.vector_store %arg9[%c0_116, %c0_117], %175 {strides = array<i32>} : memref<8x16xf32, #tpu.memory_space<vmem>>, vector<8x16xf32>,
    %c0_118 = arith.constant 0 : index
    %c0_119 = arith.constant 0 : index
    %183 = vector.load %arg10[%c0_118, %c0_119] : memref<8x1xf32, #tpu.memory_space<vmem>>, vector<8x1xf32>
    tpu.vector_store %arg10[%c0_118, %c0_119], %181 {strides = array<i32>} : memref<8x1xf32, #tpu.memory_space<vmem>>, vector<8x1xf32>,
    return
  }
  func.func @transform_0(%arg0: i32) -> (i32, i32) {
    %c0_i32 = arith.constant 0 : i32
    %c0_i32_0 = arith.constant 0 : i32
    return %arg0, %c0_i32 : i32, i32
  }
  func.func @transform_1(%arg0: i32) -> (i32, i32, i32) {
    %c0_i32 = arith.constant 0 : i32
    %c0_i32_0 = arith.constant 0 : i32
    %c0_i32_1 = arith.constant 0 : i32
    %c0_i32_2 = arith.constant 0 : i32
    return %c0_i32, %c0_i32_0, %c0_i32_1 : i32, i32, i32
  }
  func.func @transform_2(%arg0: i32) -> (i32, i32, i32) {
    %c0_i32 = arith.constant 0 : i32
    %c0_i32_0 = arith.constant 0 : i32
    %c0_i32_1 = arith.constant 0 : i32
    %c0_i32_2 = arith.constant 0 : i32
    return %c0_i32, %c0_i32_0, %c0_i32_1 : i32, i32, i32
  }
  func.func @transform_3(%arg0: i32) -> (i32, i32, i32) {
    %c0_i32 = arith.constant 0 : i32
    %c0_i32_0 = arith.constant 0 : i32
    %c0_i32_1 = arith.constant 0 : i32
    %c0_i32_2 = arith.constant 0 : i32
    return %c0_i32, %c0_i32_0, %c0_i32_1 : i32, i32, i32
  }
  func.func @transform_4(%arg0: i32) -> (i32, i32, i32, i32) {
    %c0_i32 = arith.constant 0 : i32
    %c0_i32_0 = arith.constant 0 : i32
    %c0_i32_1 = arith.constant 0 : i32
    %c0_i32_2 = arith.constant 0 : i32
    %c0_i32_3 = arith.constant 0 : i32
    return %c0_i32, %c0_i32_0, %c0_i32_1, %c0_i32_2 : i32, i32, i32, i32
  }
  func.func @transform_5(%arg0: i32) -> (i32, i32, i32, i32) {
    %c0_i32 = arith.constant 0 : i32
    %c0_i32_0 = arith.constant 0 : i32
    %c0_i32_1 = arith.constant 0 : i32
    %c0_i32_2 = arith.constant 0 : i32
    %c0_i32_3 = arith.constant 0 : i32
    return %c0_i32, %c0_i32_0, %c0_i32_1, %c0_i32_2 : i32, i32, i32, i32
  }
  func.func @transform_6(%arg0: i32) -> (i32, i32, i32) {
    %c0_i32 = arith.constant 0 : i32
    %c0_i32_0 = arith.constant 0 : i32
    %c0_i32_1 = arith.constant 0 : i32
    %c0_i32_2 = arith.constant 0 : i32
    return %c0_i32, %c0_i32_0, %c0_i32_1 : i32, i32, i32
  }
  func.func @transform_7(%arg0: i32) -> (i32, i32, i32) {
    %c0_i32 = arith.constant 0 : i32
    %c0_i32_0 = arith.constant 0 : i32
    %c0_i32_1 = arith.constant 0 : i32
    %c0_i32_2 = arith.constant 0 : i32
    return %c0_i32, %c0_i32_0, %c0_i32_1 : i32, i32, i32
  }
  func.func @transform_8(%arg0: i32) -> (i32, i32) {
    %c0_i32 = arith.constant 0 : i32
    %c0_i32_0 = arith.constant 0 : i32
    return %arg0, %c0_i32 : i32, i32
  }
  func.func @transform_9(%arg0: i32) -> (i32, i32) {
    %c0_i32 = arith.constant 0 : i32
    %c0_i32_0 = arith.constant 0 : i32
    return %arg0, %c0_i32 : i32, i32
  }
}

</mosaic_0001>

<llo_original>
// kernel: masked_nvp_flow.1
$region0: #{masked_nvp_flow.1}
  #allocation0 [shape = 'u32[]', space=smem, size = 0x4, offset = 0x4, fixed_abs, tag = 'smem constant byte address 0x4 - core index']
  #allocation1 [shape = 'u32[72,128]{1,0:T(1,128)}', space=vmem, size = 0x9000, scoped, tag = 'internal scratch']
  %s0 = inlined_call_operand.vmem [shape: f32[8,16], index: 0, kind: input, shape index: {}, may-alias: {0,8}]
  %s1 = inlined_call_operand.vmem [shape: f32[3,1,16], index: 1, kind: input, shape index: {}]
  %s2 = inlined_call_operand.vmem [shape: f32[3,16,32], index: 2, kind: input, shape index: {}]
  %s3 = inlined_call_operand.vmem [shape: f32[3,1,32], index: 3, kind: input, shape index: {}]
  %s4 = inlined_call_operand.vmem [shape: f32[3,2,32,32], index: 4, kind: input, shape index: {}]
  %s5 = inlined_call_operand.vmem [shape: f32[3,2,1,32], index: 5, kind: input, shape index: {}]
  %s6 = inlined_call_operand.vmem [shape: f32[3,32,32], index: 6, kind: input, shape index: {}]
  %s7 = inlined_call_operand.vmem [shape: f32[3,1,32], index: 7, kind: input, shape index: {}]
  %s8 = inlined_call_operand.vmem [shape: f32[8,16], index: 8, kind: output, shape index: {0}, may-alias: {0,8}]
  %s9 = inlined_call_operand.vmem [shape: f32[8,1], index: 9, kind: output, shape index: {1}]
  %10 = xla_tuple %s8, %s9
  %s11 = sld [smem:[#allocation0]]
  $region50: #{masked_nvp_flow.1} parent=0
    _
  %s13 = ssub.s32 1, %s11
  %s14 = scalar_select 0, %s13, %s11
  // Predicated region
  $region2: #{masked_nvp_flow.1} parent=0 // pred_check
    _
  $region3: #{masked_nvp_flow.1} parent=0 // pred_check_branch
    %16 = sbr.rel (0) target = $region5
  $region4: #{masked_nvp_flow.1} parent=0 // pred_region
    _
  $region5: #{masked_nvp_flow.1} parent=0 // pred_fallthru
    _
  // Predicated region
  $region6: #{masked_nvp_flow.1} parent=0 // pred_check
    _
  $region7: #{masked_nvp_flow.1} parent=0 // pred_check_branch
    %18 = sbr.rel (0) target = $region9
  $region8: #{masked_nvp_flow.1} parent=0 // pred_region
    _
  $region9: #{masked_nvp_flow.1} parent=0 // pred_fallthru
    _
  // Predicated region
  $region10: #{masked_nvp_flow.1} parent=0 // pred_check
    _
  $region11: #{masked_nvp_flow.1} parent=0 // pred_check_branch
    %20 = sbr.rel (0) target = $region13
  $region12: #{masked_nvp_flow.1} parent=0 // pred_region
    _
  $region13: #{masked_nvp_flow.1} parent=0 // pred_fallthru
    _
  // Predicated region
  $region14: #{masked_nvp_flow.1} parent=0 // pred_check
    _
  $region15: #{masked_nvp_flow.1} parent=0 // pred_check_branch
    %22 = sbr.rel (0) target = $region17
  $region16: #{masked_nvp_flow.1} parent=0 // pred_region
    _
  $region17: #{masked_nvp_flow.1} parent=0 // pred_fallthru
    _
  // Predicated region
  $region18: #{masked_nvp_flow.1} parent=0 // pred_check
    _
  $region19: #{masked_nvp_flow.1} parent=0 // pred_check_branch
    %24 = sbr.rel (0) target = $region21
  $region20: #{masked_nvp_flow.1} parent=0 // pred_region
    _
  $region21: #{masked_nvp_flow.1} parent=0 // pred_fallthru
    _
  // Predicated region
  $region22: #{masked_nvp_flow.1} parent=0 // pred_check
    _
  $region23: #{masked_nvp_flow.1} parent=0 // pred_check_branch
    %26 = sbr.rel (0) target = $region25
  $region24: #{masked_nvp_flow.1} parent=0 // pred_region
    _
  $region25: #{masked_nvp_flow.1} parent=0 // pred_fallthru
    _
  // Predicated region
  $region26: #{masked_nvp_flow.1} parent=0 // pred_check
    _
  $region27: #{masked_nvp_flow.1} parent=0 // pred_check_branch
    %28 = sbr.rel (0) target = $region29
  $region28: #{masked_nvp_flow.1} parent=0 // pred_region
    _
  $region29: #{masked_nvp_flow.1} parent=0 // pred_fallthru
    _
  // Predicated region
  $region30: #{masked_nvp_flow.1} parent=0 // pred_check
    _
  $region31: #{masked_nvp_flow.1} parent=0 // pred_check_branch
    %30 = sbr.rel (0) target = $region33
  $region32: #{masked_nvp_flow.1} parent=0 // pred_region
    _
  $region33: #{masked_nvp_flow.1} parent=0 // pred_fallthru
    _
  %v31 = vld [vmem:[%s0] sm:$0xff]
  %v32 = vld [vmem:[%s1] sm:$0x1]
  %v33 = vsub.f32 1.0, %v32
  %v35 = vperm.slane %v32, 0
  %v37 = vmul.f32 %v35, %v31
  %v38 = vld [vmem:[%s2] sm:$0xff]
  %v39 = vld [vmem:[%s2 + $0x8] sm:$0xff]
  %v40 = vld [vmem:[%s3] sm:$0x1]
  %v42 = vperm.slane %v40, 0
  %vm44 = vcmask 130048
  %v46 = vsel %vm44, %v37, 0
  %48 = vmatpush.msra.mxu0 0.0
  %49 = vmatpush.msra.mxu0 0.0
  %50 = vmatpush.msra.mxu0 0.0
  %51 = vmatpush.msra.mxu0 0.0
  %52 = vmatpush.msra.mxu0 0.0
  %53 = vmatpush.msra.mxu0 0.0
  %54 = vmatpush.msra.mxu0 0.0
  %55 = vmatpush.msra.mxu0 0.0
  %56 = vmatpush.msra.mxu0 0.0
  %57 = vmatpush.msra.mxu0 0.0
  %58 = vmatpush.msra.mxu0 0.0
  %59 = vmatpush.msra.mxu0 0.0
  %60 = vmatpush.msra.mxu0 0.0
  %61 = vmatpush.msra.mxu0 0.0
  %62 = vmatpush.msra.mxu0 %v39
  %63 = vmatpush.msra.mxu0 %v38
  %64 = vmatmul.f32.gmra.mxu0 %v46
  %v65 = vpop.f32.mrf.mxu0
  %v66 = vadd.f32 %v42, %v65
  %67 = vdwg.mxu0
  %v68 = vtanh.pop %v66
  %v69 = vld [vmem:[%s4] sm:$0xff]
  %v70 = vld [vmem:[%s4 + $0x8] sm:$0xff]
  %v71 = vld [vmem:[%s4 + $0x10] sm:$0xff]
  %v72 = vld [vmem:[%s4 + $0x18] sm:$0xff]
  %v73 = vld [vmem:[%s5] sm:$0x1]
  %v75 = vperm.slane %v73, 0
  %vm77 = vcmask 261120
  %v79 = vsel %vm77, %v68, 0
  %81 = vmatpush.msra.mxu0 0.0
  %82 = vmatpush.msra.mxu0 0.0
  %83 = vmatpush.msra.mxu0 0.0
  %84 = vmatpush.msra.mxu0 0.0
  %85 = vmatpush.msra.mxu0 0.0
  %86 = vmatpush.msra.mxu0 0.0
  %87 = vmatpush.msra.mxu0 0.0
  %88 = vmatpush.msra.mxu0 0.0
  %89 = vmatpush.msra.mxu0 0.0
  %90 = vmatpush.msra.mxu0 0.0
  %91 = vmatpush.msra.mxu0 0.0
  %92 = vmatpush.msra.mxu0 0.0
  %93 = vmatpush.msra.mxu0 %v72
  %94 = vmatpush.msra.mxu0 %v71
  %95 = vmatpush.msra.mxu0 %v70
  %96 = vmatpush.msra.mxu0 %v69
  %97 = vmatmul.f32.gmra.mxu0 %v79
  %v98 = vpop.f32.mrf.mxu0
  %v99 = vadd.f32 %v75, %v98
  %100 = vdwg.mxu0
  %v101 = vtanh.pop %v99
  %s102 = scalar_lea.vmem %s4, 32
  %v103 = vld [vmem:[%s102] sm:$0xff]
  %v104 = vld [vmem:[%s102 + $0x8] sm:$0xff]
  %v105 = vld [vmem:[%s102 + $0x10] sm:$0xff]
  %v106 = vld [vmem:[%s102 + $0x18] sm:$0xff]
  %s107 = scalar_lea.vmem %s5, 1
  %v108 = vld [vmem:[%s107] sm:$0x1]
  %v110 = vperm.slane %v108, 0
  %v113 = vsel %vm77, %v101, 0
  %115 = vmatpush.msra.mxu0 0.0
  %116 = vmatpush.msra.mxu0 0.0
  %117 = vmatpush.msra.mxu0 0.0
  %118 = vmatpush.msra.mxu0 0.0
  %119 = vmatpush.msra.mxu0 0.0
  %120 = vmatpush.msra.mxu0 0.0
  %121 = vmatpush.msra.mxu0 0.0
  %122 = vmatpush.msra.mxu0 0.0
  %123 = vmatpush.msra.mxu0 0.0
  %124 = vmatpush.msra.mxu0 0.0
  %125 = vmatpush.msra.mxu0 0.0
  %126 = vmatpush.msra.mxu0 0.0
  %127 = vmatpush.msra.mxu0 %v106
  %128 = vmatpush.msra.mxu0 %v105
  %129 = vmatpush.msra.mxu0 %v104
  %130 = vmatpush.msra.mxu0 %v103
  %131 = vmatmul.f32.gmra.mxu0 %v113
  %v132 = vpop.f32.mrf.mxu0
  %v133 = vadd.f32 %v110, %v132
  %134 = vdwg.mxu0
  %v135 = vtanh.pop %v133
  %v136 = vld [vmem:[%s6] sm:$0xff]
  %v137 = vld [vmem:[%s6 + $0x8] sm:$0xff]
  %v138 = vld [vmem:[%s6 + $0x10] sm:$0xff]
  %v139 = vld [vmem:[%s6 + $0x18] sm:$0xff]
  %v140 = vld [vmem:[%s7] sm:$0x1]
  %v142 = vperm.slane %v140, 0
  %v145 = vsel %vm77, %v135, 0
  %147 = vmatpush.msra.mxu0 0.0
  %148 = vmatpush.msra.mxu0 0.0
  %149 = vmatpush.msra.mxu0 0.0
  %150 = vmatpush.msra.mxu0 0.0
  %151 = vmatpush.msra.mxu0 0.0
  %152 = vmatpush.msra.mxu0 0.0
  %153 = vmatpush.msra.mxu0 0.0
  %154 = vmatpush.msra.mxu0 0.0
  %155 = vmatpush.msra.mxu0 0.0
  %156 = vmatpush.msra.mxu0 0.0
  %157 = vmatpush.msra.mxu0 0.0
  %158 = vmatpush.msra.mxu0 0.0
  %159 = vmatpush.msra.mxu0 %v139
  %160 = vmatpush.msra.mxu0 %v138
  %161 = vmatpush.msra.mxu0 %v137
  %162 = vmatpush.msra.mxu0 %v136
  %163 = vmatmul.f32.gmra.mxu0 %v145
  %v164 = vpop.f32.mrf.mxu0
  %v165 = vadd.f32 %v142, %v164
  %166 = vdwg.mxu0
  %v167 = vxor.u32 %v165, 2147483648
  %v168 = vmul.f32 %v167, 1.442695
  %v169 = vpow.pop %v168
  %v170 = vadd.f32 %v169, 1.0
  %v171 = vrcp.pop %v170
  %v172 = vmul.f32 %v170, %v171
  %v173 = vsub.f32 1.0, %v172
  %v174 = vmul.f32 %v171, %v173
  %v175 = vadd.f32 %v171, %v174
  %vm176 = vweird.f32 %v170
  %vm177 = vweird.f32 %v171
  %vm178 = vmor %vm176, %vm177
  %v179 = vsel %vm178, %v171, %v175
  %v180 = vand.u32 2147483647, %v170
  %vm181 = vcmp.eq.f32.partialorder %v180, 8.507059e+37
  %v182 = vand.u32 %v170, 2147483648
  %v183 = vor.u32 1.1754944e-38, %v182
  %v184 = vsel %vm181, %v183, %v179
  %v185 = vmul.f32 1.0, %v184
  %v186 = vsub.f32 1.0, %v185
  %188 = vrot.lane.b32.xlu0 %v185, 112
  %v189 = vpop.permute.xlu0 %188
  %v191 = vmul.f32 %v31, %v189
  %193 = vrot.lane.b32.xlu0 %v165, 16
  %v194 = vpop.permute.xlu0 %193
  %v196 = vmul.f32 %v186, %v194
  %198 = vrot.lane.b32.xlu0 %v196, 112
  %v199 = vpop.permute.xlu0 %198
  %v201 = vadd.f32 %v191, %v199
  %v203 = vperm.slane %v33, 0
  %v205 = vmul.f32 %v203, %v201
  %v206 = vadd.f32 %v205, %v37
  %v207 = vlog2.pop %v185
  %v208 = vmul.f32 %v207, 0.6931472
  %210 = vrot.lane.b32.xlu0 %v208, 112
  %v211 = vpop.permute.xlu0 %210
  %v213 = vmul.f32 %v203, %v211
  %v214 = vsel %vm44, %v213, 0.0
  %215 = vadd.xlane.f32.xlu0 %v214
  %v216 = vpop.xlane.xlu0 %215
  %v217 = vadd.f32 %v216, 0.0
  %s218 = scalar_lea.vmem %s1, 1
  %v219 = vld [vmem:[%s218] sm:$0x1]
  %v220 = vsub.f32 1.0, %v219
  %v222 = vperm.slane %v219, 0
  %v224 = vmul.f32 %v222, %v206
  %s225 = scalar_lea.vmem %s2, 16
  %v226 = vld [vmem:[%s225] sm:$0xff]
  %v227 = vld [vmem:[%s225 + $0x8] sm:$0xff]
  %s228 = scalar_lea.vmem %s3, 1
  %v229 = vld [vmem:[%s228] sm:$0x1]
  %v231 = vperm.slane %v229, 0
  %v234 = vsel %vm44, %v224, 0
  %236 = vmatpush.msra.mxu0 0.0
  %237 = vmatpush.msra.mxu0 0.0
  %238 = vmatpush.msra.mxu0 0.0
  %239 = vmatpush.msra.mxu0 0.0
  %240 = vmatpush.msra.mxu0 0.0
  %241 = vmatpush.msra.mxu0 0.0
  %242 = vmatpush.msra.mxu0 0.0
  %243 = vmatpush.msra.mxu0 0.0
  %244 = vmatpush.msra.mxu0 0.0
  %245 = vmatpush.msra.mxu0 0.0
  %246 = vmatpush.msra.mxu0 0.0
  %247 = vmatpush.msra.mxu0 0.0
  %248 = vmatpush.msra.mxu0 0.0
  %249 = vmatpush.msra.mxu0 0.0
  %250 = vmatpush.msra.mxu0 %v227
  %251 = vmatpush.msra.mxu0 %v226
  %252 = vmatmul.f32.gmra.mxu0 %v234
  %v253 = vpop.f32.mrf.mxu0
  %v254 = vadd.f32 %v231, %v253
  %255 = vdwg.mxu0
  %v256 = vtanh.pop %v254
  %s257 = scalar_lea.vmem %s4, 64
  %v258 = vld [vmem:[%s257] sm:$0xff]
  %v259 = vld [vmem:[%s257 + $0x8] sm:$0xff]
  %v260 = vld [vmem:[%s257 + $0x10] sm:$0xff]
  %v261 = vld [vmem:[%s257 + $0x18] sm:$0xff]
  %s262 = scalar_lea.vmem %s5, 2
  %v263 = vld [vmem:[%s262] sm:$0x1]
  %v265 = vperm.slane %v263, 0
  %v268 = vsel %vm77, %v256, 0
  %270 = vmatpush.msra.mxu0 0.0
  %271 = vmatpush.msra.mxu0 0.0
  %272 = vmatpush.msra.mxu0 0.0
  %273 = vmatpush.msra.mxu0 0.0
  %274 = vmatpush.msra.mxu0 0.0
  %275 = vmatpush.msra.mxu0 0.0
  %276 = vmatpush.msra.mxu0 0.0
  %277 = vmatpush.msra.mxu0 0.0
  %278 = vmatpush.msra.mxu0 0.0
  %279 = vmatpush.msra.mxu0 0.0
  %280 = vmatpush.msra.mxu0 0.0
  %281 = vmatpush.msra.mxu0 0.0
  %282 = vmatpush.msra.mxu0 %v261
  %283 = vmatpush.msra.mxu0 %v260
  %284 = vmatpush.msra.mxu0 %v259
  %285 = vmatpush.msra.mxu0 %v258
  %286 = vmatmul.f32.gmra.mxu0 %v268
  %v287 = vpop.f32.mrf.mxu0
  %v288 = vadd.f32 %v265, %v287
  %289 = vdwg.mxu0
  %v290 = vtanh.pop %v288
  %s291 = scalar_lea.vmem %s4, 96
  %v292 = vld [vmem:[%s291] sm:$0xff]
  %v293 = vld [vmem:[%s291 + $0x8] sm:$0xff]
  %v294 = vld [vmem:[%s291 + $0x10] sm:$0xff]
  %v295 = vld [vmem:[%s291 + $0x18] sm:$0xff]
  %s296 = scalar_lea.vmem %s5, 3
  %v297 = vld [vmem:[%s296] sm:$0x1]
  %v299 = vperm.slane %v297, 0
  %v302 = vsel %vm77, %v290, 0
  %304 = vmatpush.msra.mxu0 0.0
  %305 = vmatpush.msra.mxu0 0.0
  %306 = vmatpush.msra.mxu0 0.0
  %307 = vmatpush.msra.mxu0 0.0
  %308 = vmatpush.msra.mxu0 0.0
  %309 = vmatpush.msra.mxu0 0.0
  %310 = vmatpush.msra.mxu0 0.0
  %311 = vmatpush.msra.mxu0 0.0
  %312 = vmatpush.msra.mxu0 0.0
  %313 = vmatpush.msra.mxu0 0.0
  %314 = vmatpush.msra.mxu0 0.0
  %315 = vmatpush.msra.mxu0 0.0
  %316 = vmatpush.msra.mxu0 %v295
  %317 = vmatpush.msra.mxu0 %v294
  %318 = vmatpush.msra.mxu0 %v293
  %319 = vmatpush.msra.mxu0 %v292
  %320 = vmatmul.f32.gmra.mxu0 %v302
  %v321 = vpop.f32.mrf.mxu0
  %v322 = vadd.f32 %v299, %v321
  %323 = vdwg.mxu0
  %v324 = vtanh.pop %v322
  %s325 = scalar_lea.vmem %s6, 32
  %v326 = vld [vmem:[%s325] sm:$0xff]
  %v327 = vld [vmem:[%s325 + $0x8] sm:$0xff]
  %v328 = vld [vmem:[%s325 + $0x10] sm:$0xff]
  %v329 = vld [vmem:[%s325 + $0x18] sm:$0xff]
  %s330 = scalar_lea.vmem %s7, 1
  %v331 = vld [vmem:[%s330] sm:$0x1]
  %v333 = vperm.slane %v331, 0
  %v336 = vsel %vm77, %v324, 0
  %338 = vmatpush.msra.mxu0 0.0
  %339 = vmatpush.msra.mxu0 0.0
  %340 = vmatpush.msra.mxu0 0.0
  %341 = vmatpush.msra.mxu0 0.0
  %342 = vmatpush.msra.mxu0 0.0
  %343 = vmatpush.msra.mxu0 0.0
  %344 = vmatpush.msra.mxu0 0.0
  %345 = vmatpush.msra.mxu0 0.0
  %346 = vmatpush.msra.mxu0 0.0
  %347 = vmatpush.msra.mxu0 0.0
  %348 = vmatpush.msra.mxu0 0.0
  %349 = vmatpush.msra.mxu0 0.0
  %350 = vmatpush.msra.mxu0 %v329
  %351 = vmatpush.msra.mxu0 %v328
  %352 = vmatpush.msra.mxu0 %v327
  %353 = vmatpush.msra.mxu0 %v326
  %354 = vmatmul.f32.gmra.mxu0 %v336
  %v355 = vpop.f32.mrf.mxu0
  %v356 = vadd.f32 %v333, %v355
  %357 = vdwg.mxu0
  %v358 = vxor.u32 %v356, 2147483648
  %v359 = vmul.f32 %v358, 1.442695
  %v360 = vpow.pop %v359
  %v361 = vadd.f32 %v360, 1.0
  %v362 = vrcp.pop %v361
  %v363 = vmul.f32 %v361, %v362
  %v364 = vsub.f32 1.0, %v363
  %v365 = vmul.f32 %v362, %v364
  %v366 = vadd.f32 %v362, %v365
  %vm367 = vweird.f32 %v361
  %vm368 = vweird.f32 %v362
  %vm369 = vmor %vm367, %vm368
  %v370 = vsel %vm369, %v362, %v366
  %v371 = vand.u32 2147483647, %v361
  %vm372 = vcmp.eq.f32.partialorder %v371, 8.507059e+37
  %v373 = vand.u32 %v361, 2147483648
  %v374 = vor.u32 1.1754944e-38, %v373
  %v375 = vsel %vm372, %v374, %v370
  %v376 = vmul.f32 1.0, %v375
  %v377 = vsub.f32 1.0, %v376
  %379 = vrot.lane.b32.xlu0 %v376, 112
  %v380 = vpop.permute.xlu0 %379
  %v382 = vmul.f32 %v206, %v380
  %384 = vrot.lane.b32.xlu0 %v356, 16
  %v385 = vpop.permute.xlu0 %384
  %v387 = vmul.f32 %v377, %v385
  %389 = vrot.lane.b32.xlu0 %v387, 112
  %v390 = vpop.permute.xlu0 %389
  %v392 = vadd.f32 %v382, %v390
  %v394 = vperm.slane %v220, 0
  %v396 = vmul.f32 %v394, %v392
  %v397 = vadd.f32 %v396, %v224
  %v398 = vlog2.pop %v376
  %v399 = vmul.f32 %v398, 0.6931472
  %401 = vrot.lane.b32.xlu0 %v399, 112
  %v402 = vpop.permute.xlu0 %401
  %v404 = vmul.f32 %v394, %v402
  %v405 = vsel %vm44, %v404, 0.0
  %406 = vadd.xlane.f32.xlu0 %v405
  %v407 = vpop.xlane.xlu0 %406
  %v408 = vadd.f32 %v217, %v407
  %s409 = scalar_lea.vmem %s1, 2
  %v410 = vld [vmem:[%s409] sm:$0x1]
  %v411 = vsub.f32 1.0, %v410
  %v413 = vperm.slane %v410, 0
  %v415 = vmul.f32 %v413, %v397
  %s416 = scalar_lea.vmem %s2, 32
  %v417 = vld [vmem:[%s416] sm:$0xff]
  %v418 = vld [vmem:[%s416 + $0x8] sm:$0xff]
  %s419 = scalar_lea.vmem %s3, 2
  %v420 = vld [vmem:[%s419] sm:$0x1]
  %v422 = vperm.slane %v420, 0
  %v425 = vsel %vm44, %v415, 0
  %427 = vmatpush.msra.mxu0 0.0
  %428 = vmatpush.msra.mxu0 0.0
  %429 = vmatpush.msra.mxu0 0.0
  %430 = vmatpush.msra.mxu0 0.0
  %431 = vmatpush.msra.mxu0 0.0
  %432 = vmatpush.msra.mxu0 0.0
  %433 = vmatpush.msra.mxu0 0.0
  %434 = vmatpush.msra.mxu0 0.0
  %435 = vmatpush.msra.mxu0 0.0
  %436 = vmatpush.msra.mxu0 0.0
  %437 = vmatpush.msra.mxu0 0.0
  %438 = vmatpush.msra.mxu0 0.0
  %439 = vmatpush.msra.mxu0 0.0
  %440 = vmatpush.msra.mxu0 0.0
  %441 = vmatpush.msra.mxu0 %v418
  %442 = vmatpush.msra.mxu0 %v417
  %443 = vmatmul.f32.gmra.mxu0 %v425
  %v444 = vpop.f32.mrf.mxu0
  %v445 = vadd.f32 %v422, %v444
  %446 = vdwg.mxu0
  %v447 = vtanh.pop %v445
  %s448 = scalar_lea.vmem %s4, 128
  %v449 = vld [vmem:[%s448] sm:$0xff]
  %v450 = vld [vmem:[%s448 + $0x8] sm:$0xff]
  %v451 = vld [vmem:[%s448 + $0x10] sm:$0xff]
  %v452 = vld [vmem:[%s448 + $0x18] sm:$0xff]
  %s453 = scalar_lea.vmem %s5, 4
  %v454 = vld [vmem:[%s453] sm:$0x1]
  %v456 = vperm.slane %v454, 0
  %v459 = vsel %vm77, %v447, 0
  %461 = vmatpush.msra.mxu0 0.0
  %462 = vmatpush.msra.mxu0 0.0
  %463 = vmatpush.msra.mxu0 0.0
  %464 = vmatpush.msra.mxu0 0.0
  %465 = vmatpush.msra.mxu0 0.0
  %466 = vmatpush.msra.mxu0 0.0
  %467 = vmatpush.msra.mxu0 0.0
  %468 = vmatpush.msra.mxu0 0.0
  %469 = vmatpush.msra.mxu0 0.0
  %470 = vmatpush.msra.mxu0 0.0
  %471 = vmatpush.msra.mxu0 0.0
  %472 = vmatpush.msra.mxu0 0.0
  %473 = vmatpush.msra.mxu0 %v452
  %474 = vmatpush.msra.mxu0 %v451
  %475 = vmatpush.msra.mxu0 %v450
  %476 = vmatpush.msra.mxu0 %v449
  %477 = vmatmul.f32.gmra.mxu0 %v459
  %v478 = vpop.f32.mrf.mxu0
  %v479 = vadd.f32 %v456, %v478
  %480 = vdwg.mxu0
  %v481 = vtanh.pop %v479
  %s482 = scalar_lea.vmem %s4, 160
  %v483 = vld [vmem:[%s482] sm:$0xff]
  %v484 = vld [vmem:[%s482 + $0x8] sm:$0xff]
  %v485 = vld [vmem:[%s482 + $0x10] sm:$0xff]
  %v486 = vld [vmem:[%s482 + $0x18] sm:$0xff]
  %s487 = scalar_lea.vmem %s5, 5
  %v488 = vld [vmem:[%s487] sm:$0x1]
  %v490 = vperm.slane %v488, 0
  %v493 = vsel %vm77, %v481, 0
  %495 = vmatpush.msra.mxu0 0.0
  %496 = vmatpush.msra.mxu0 0.0
  %497 = vmatpush.msra.mxu0 0.0
  %498 = vmatpush.msra.mxu0 0.0
  %499 = vmatpush.msra.mxu0 0.0
  %500 = vmatpush.msra.mxu0 0.0
  %501 = vmatpush.msra.mxu0 0.0
  %502 = vmatpush.msra.mxu0 0.0
  %503 = vmatpush.msra.mxu0 0.0
  %504 = vmatpush.msra.mxu0 0.0
  %505 = vmatpush.msra.mxu0 0.0
  %506 = vmatpush.msra.mxu0 0.0
  %507 = vmatpush.msra.mxu0 %v486
  %508 = vmatpush.msra.mxu0 %v485
  %509 = vmatpush.msra.mxu0 %v484
  %510 = vmatpush.msra.mxu0 %v483
  %511 = vmatmul.f32.gmra.mxu0 %v493
  %v512 = vpop.f32.mrf.mxu0
  %v513 = vadd.f32 %v490, %v512
  %514 = vdwg.mxu0
  %v515 = vtanh.pop %v513
  %s516 = scalar_lea.vmem %s6, 64
  %v517 = vld [vmem:[%s516] sm:$0xff]
  %v518 = vld [vmem:[%s516 + $0x8] sm:$0xff]
  %v519 = vld [vmem:[%s516 + $0x10] sm:$0xff]
  %v520 = vld [vmem:[%s516 + $0x18] sm:$0xff]
  %s521 = scalar_lea.vmem %s7, 2
  %v522 = vld [vmem:[%s521] sm:$0x1]
  %v524 = vperm.slane %v522, 0
  %v527 = vsel %vm77, %v515, 0
  %529 = vmatpush.msra.mxu0 0.0
  %530 = vmatpush.msra.mxu0 0.0
  %531 = vmatpush.msra.mxu0 0.0
  %532 = vmatpush.msra.mxu0 0.0
  %533 = vmatpush.msra.mxu0 0.0
  %534 = vmatpush.msra.mxu0 0.0
  %535 = vmatpush.msra.mxu0 0.0
  %536 = vmatpush.msra.mxu0 0.0
  %537 = vmatpush.msra.mxu0 0.0
  %538 = vmatpush.msra.mxu0 0.0
  %539 = vmatpush.msra.mxu0 0.0
  %540 = vmatpush.msra.mxu0 0.0
  %541 = vmatpush.msra.mxu0 %v520
  %542 = vmatpush.msra.mxu0 %v519
  %543 = vmatpush.msra.mxu0 %v518
  %544 = vmatpush.msra.mxu0 %v517
  %545 = vmatmul.f32.gmra.mxu0 %v527
  %v546 = vpop.f32.mrf.mxu0
  %v547 = vadd.f32 %v524, %v546
  %548 = vdwg.mxu0
  %v549 = vxor.u32 %v547, 2147483648
  %v550 = vmul.f32 %v549, 1.442695
  %v551 = vpow.pop %v550
  %v552 = vadd.f32 %v551, 1.0
  %v553 = vrcp.pop %v552
  %v554 = vmul.f32 %v552, %v553
  %v555 = vsub.f32 1.0, %v554
  %v556 = vmul.f32 %v553, %v555
  %v557 = vadd.f32 %v553, %v556
  %vm558 = vweird.f32 %v552
  %vm559 = vweird.f32 %v553
  %vm560 = vmor %vm558, %vm559
  %v561 = vsel %vm560, %v553, %v557
  %v562 = vand.u32 2147483647, %v552
  %vm563 = vcmp.eq.f32.partialorder %v562, 8.507059e+37
  %v564 = vand.u32 %v552, 2147483648
  %v565 = vor.u32 1.1754944e-38, %v564
  %v566 = vsel %vm563, %v565, %v561
  %v567 = vmul.f32 1.0, %v566
  %v568 = vsub.f32 1.0, %v567
  %570 = vrot.lane.b32.xlu0 %v567, 112
  %v571 = vpop.permute.xlu0 %570
  %v573 = vmul.f32 %v397, %v571
  %575 = vrot.lane.b32.xlu0 %v547, 16
  %v576 = vpop.permute.xlu0 %575
  %v578 = vmul.f32 %v568, %v576
  %580 = vrot.lane.b32.xlu0 %v578, 112
  %v581 = vpop.permute.xlu0 %580
  %v583 = vadd.f32 %v573, %v581
  %v585 = vperm.slane %v411, 0
  %v587 = vmul.f32 %v585, %v583
  %v588 = vadd.f32 %v587, %v415
  %v589 = vlog2.pop %v567
  %v590 = vmul.f32 %v589, 0.6931472
  %592 = vrot.lane.b32.xlu0 %v590, 112
  %v593 = vpop.permute.xlu0 %592
  %v595 = vmul.f32 %v585, %v593
  %v596 = vsel %vm44, %v595, 0.0
  %597 = vadd.xlane.f32.xlu0 %v596
  %v598 = vpop.xlane.xlu0 %597
  %v599 = vadd.f32 %v408, %v598
  %600 = vst.msk [vmem:[%s8] sm:$0xff] %vm44, %v588
  %vm601 = vcmask 7168
  %602 = vst.msk [vmem:[%s9] sm:$0xff] %vm601, %v599
  // Predicated region
  $region34: #{masked_nvp_flow.1} parent=0 // pred_check
    _
  $region35: #{masked_nvp_flow.1} parent=0 // pred_check_branch
    %604 = sbr.rel (0) target = $region37
  $region36: #{masked_nvp_flow.1} parent=0 // pred_region
    _
  $region37: #{masked_nvp_flow.1} parent=0 // pred_fallthru
    _
  // Predicated region
  $region38: #{masked_nvp_flow.1} parent=0 // pred_check
    _
  $region39: #{masked_nvp_flow.1} parent=0 // pred_check_branch
    %606 = sbr.rel (0) target = $region41
  $region40: #{masked_nvp_flow.1} parent=0 // pred_region
    _
  $region41: #{masked_nvp_flow.1} parent=0 // pred_fallthru
    _
  // Predicated region
  $region42: #{masked_nvp_flow.1} parent=0 // pred_check
    _
  $region43: #{masked_nvp_flow.1} parent=0 // pred_check_branch
    %608 = sbr.rel (0) target = $region45
  $region44: #{masked_nvp_flow.1} parent=0 // pred_region
    _
  $region45: #{masked_nvp_flow.1} parent=0 // pred_fallthru
    _
  // Predicated region
  $region46: #{masked_nvp_flow.1} parent=0 // pred_check
    _
  $region47: #{masked_nvp_flow.1} parent=0 // pred_check_branch
    %610 = sbr.rel (0) target = $region49
  $region48: #{masked_nvp_flow.1} parent=0 // pred_region
    _
  $region49: #{masked_nvp_flow.1} parent=0 // pred_fallthru
    _

</llo_original>
